<compile_context>
chip_gen: v7x
topology: tpu7x:2x2x1
jax: 0.10.0
libtpu: 0.0.40
codegen_flags: <defaults>
</compile_context>

<pallas_src>
import jax
import jax.numpy as jnp
import numpy as np
from jax.experimental import pallas as pl
from jax.experimental.pallas import tpu as pltpu


def _round_up(x, m):
    return ((x + m - 1) // m) * m


def _pick_lane_tile(hw_padded):
    """Largest lane-dense tile (multiple of 128) that divides the pixel axis."""
    for cand in (4096, 2048, 1024, 512, 256, 128):
        if hw_padded % cand == 0:
            return cand
    return hw_padded  # unreachable: hw_padded is always a multiple of 128


def _dp_end_kernel(w_ref, b_ref, ua_ref, fi_ref, o_ref):
    """One (1, 3, T) tile: fused (ua+1)*(fi+1)*0.5-1 and 1x1 conv (3 -> 3).

    w_ref: (3, 3) f32 in SMEM, b_ref: (3,) f32 in SMEM.
    ua_ref / fi_ref / o_ref: (1, 3, T) f32 VMEM blocks, pixels on lanes.
    """
    p = (ua_ref[...] + 1.0) * (fi_ref[...] + 1.0) * 0.5 - 1.0   # (1, 3, T)
    c0 = p[:, 0:1, :]
    c1 = p[:, 1:2, :]
    c2 = p[:, 2:3, :]
    for co in range(3):  # unrolled: 9 VPU broadcast FMAs + bias, no MXU
        o_ref[:, co:co + 1, :] = (w_ref[co, 0] * c0
                                  + w_ref[co, 1] * c1
                                  + w_ref[co, 2] * c2
                                  + b_ref[co])


@jax.jit
def dp_end(ua, fi, w, b):
    """DP_end forward.

    ua, fi: (N, 3, H, W) float32 (NCHW, as in the PyTorch module)
    w:      (3, 3, 1, 1) float32 (Conv2d weight, PyTorch layout)
    b:      (3,) float32         (Conv2d bias)
    returns (N, 3, H, W) float32
    """
    N, C, H, W = ua.shape
    assert C == 3 and fi.shape == ua.shape
    HW = H * W
    HWp = _round_up(HW, 128)

    ua2 = ua.reshape(N, 3, HW)
    fi2 = fi.reshape(N, 3, HW)
    if HWp != HW:
        pad = ((0, 0), (0, 0), (0, HWp - HW))
        ua2 = jnp.pad(ua2, pad)
        fi2 = jnp.pad(fi2, pad)

    T = _pick_lane_tile(HWp)
    grid = (N, HWp // T)

    wm = w.reshape(3, 3).astype(jnp.float32)
    bv = b.reshape(3).astype(jnp.float32)

    out = pl.pallas_call(
        _dp_end_kernel,
        out_shape=jax.ShapeDtypeStruct((N, 3, HWp), jnp.float32),
        grid_spec=pltpu.PrefetchScalarGridSpec(
            num_scalar_prefetch=0,
            grid=grid,
            in_specs=[
                pl.BlockSpec(memory_space=pltpu.MemorySpace.SMEM),   # w (3,3)
                pl.BlockSpec(memory_space=pltpu.MemorySpace.SMEM),   # b (3,)
                pl.BlockSpec((1, 3, T), lambda n, t: (n, 0, t)),     # ua tile
                pl.BlockSpec((1, 3, T), lambda n, t: (n, 0, t)),     # fi tile
            ],
            out_specs=pl.BlockSpec((1, 3, T), lambda n, t: (n, 0, t)),
        ),
        compiler_params=pltpu.CompilerParams(
            dimension_semantics=("parallel", "parallel")),
    )(wm, bv, ua2, fi2)

    if HWp != HW:
        out = out[:, :, :HW]
    return out.reshape(N, 3, H, W)


def dp_end_ref(ua, fi, w, b):
    """Pure-JAX reference (mirrors the PyTorch forward)."""
    p1 = (ua + 1.0) * (fi + 1.0) * 0.5 - 1.0
    out = jnp.einsum("oc,nchw->nohw", w.reshape(3, 3), p1)
    return out + b.reshape(1, 3, 1, 1)


if __name__ == "__main__":
    key = jax.random.PRNGKey(0)
    k_ua, k_fi, k_w, k_b = jax.random.split(key, 4)

    # Small NCHW shapes consistent with DP_end (Conv2d(3, 3, 1)): batch=2,
    # channels=3, spatial=16x16.
    N, C, H, W = 2, 3, 16, 16
    ua = jax.random.normal(k_ua, (N, C, H, W), jnp.float32)
    fi = jax.random.normal(k_fi, (N, C, H, W), jnp.float32)
    w = jax.random.normal(k_w, (3, 3, 1, 1), jnp.float32) * (1.0 / 3.0) ** 0.5
    b = jax.random.normal(k_b, (3,), jnp.float32) * 0.01

    out = dp_end(ua, fi, w, b)
    jax.block_until_ready(out)

    ref = dp_end_ref(ua, fi, w, b)
    assert out.shape == (N, 3, H, W)
    assert np.allclose(np.asarray(out), np.asarray(ref), atol=1e-5, rtol=1e-5)
    print("KERNEL_OK")
</pallas_src>

<mosaic_0001>
module attributes {stable_mosaic.version = 11 : i64} {
  func.func @_dp_end_kernel(%arg0: i32, %arg1: i32, %arg2: memref<3x3xf32, #tpu.memory_space<smem>>, %arg3: memref<3xf32, #tpu.memory_space<smem>>, %arg4: memref<1x3x256xf32, #tpu.memory_space<vmem>>, %arg5: memref<1x3x256xf32, #tpu.memory_space<vmem>>, %arg6: memref<1x3x256xf32, #tpu.memory_space<vmem>>) attributes {dimension_semantics = [#tpu.dimension_semantics<parallel>, #tpu.dimension_semantics<parallel>], iteration_bounds = array<i64: 2, 1>, scalar_prefetch = 0 : i64, scratch_operands = 0 : i64, tpu.core_type = #tpu.core_type<tc>, window_params = [{transform_indices = @transform_0, window_bounds = array<i64: 3, 3>}, {transform_indices = @transform_1, window_bounds = array<i64: 3>}, {transform_indices = @transform_2, window_bounds = array<i64: 1, 3, 256>}, {transform_indices = @transform_3, window_bounds = array<i64: 1, 3, 256>}, {transform_indices = @transform_4, window_bounds = array<i64: 1, 3, 256>}]} {
    %c0 = arith.constant 0 : index
    %c0_0 = arith.constant 0 : index
    %c0_1 = arith.constant 0 : index
    %0 = vector.load %arg4[%c0, %c0_0, %c0_1] : memref<1x3x256xf32, #tpu.memory_space<vmem>>, vector<1x3x256xf32>
    %cst = arith.constant 1.000000e+00 : f32
    %1 = vector.broadcast %cst : f32 to vector<1x3x256xf32>
    %2 = arith.addf %0, %1 : vector<1x3x256xf32>
    %c0_2 = arith.constant 0 : index
    %c0_3 = arith.constant 0 : index
    %c0_4 = arith.constant 0 : index
    %3 = vector.load %arg5[%c0_2, %c0_3, %c0_4] : memref<1x3x256xf32, #tpu.memory_space<vmem>>, vector<1x3x256xf32>
    %cst_5 = arith.constant 1.000000e+00 : f32
    %4 = vector.broadcast %cst_5 : f32 to vector<1x3x256xf32>
    %5 = arith.addf %3, %4 : vector<1x3x256xf32>
    %6 = arith.mulf %2, %5 : vector<1x3x256xf32>
    %cst_6 = arith.constant 5.000000e-01 : f32
    %7 = vector.broadcast %cst_6 : f32 to vector<1x3x256xf32>
    %8 = arith.mulf %6, %7 : vector<1x3x256xf32>
    %cst_7 = arith.constant 1.000000e+00 : f32
    %9 = vector.broadcast %cst_7 : f32 to vector<1x3x256xf32>
    %10 = arith.subf %8, %9 : vector<1x3x256xf32>
    %11 = vector.extract_strided_slice %10 {offsets = [0, 0, 0], sizes = [1, 1, 256], strides = [1, 1, 1]} : vector<1x3x256xf32> to vector<1x1x256xf32>
    %12 = vector.extract_strided_slice %10 {offsets = [0, 1, 0], sizes = [1, 1, 256], strides = [1, 1, 1]} : vector<1x3x256xf32> to vector<1x1x256xf32>
    %13 = vector.extract_strided_slice %10 {offsets = [0, 2, 0], sizes = [1, 1, 256], strides = [1, 1, 1]} : vector<1x3x256xf32> to vector<1x1x256xf32>
    %c0_8 = arith.constant 0 : index
    %c0_9 = arith.constant 0 : index
    %14 = memref.load %arg2[%c0_8, %c0_9] : memref<3x3xf32, #tpu.memory_space<smem>>
    %15 = vector.broadcast %14 : f32 to vector<1x1x256xf32>
    %16 = arith.mulf %15, %11 : vector<1x1x256xf32>
    %c0_10 = arith.constant 0 : index
    %c1 = arith.constant 1 : index
    %17 = memref.load %arg2[%c0_10, %c1] : memref<3x3xf32, #tpu.memory_space<smem>>
    %18 = vector.broadcast %17 : f32 to vector<1x1x256xf32>
    %19 = arith.mulf %18, %12 : vector<1x1x256xf32>
    %20 = arith.addf %16, %19 : vector<1x1x256xf32>
    %c0_11 = arith.constant 0 : index
    %c2 = arith.constant 2 : index
    %21 = memref.load %arg2[%c0_11, %c2] : memref<3x3xf32, #tpu.memory_space<smem>>
    %22 = vector.broadcast %21 : f32 to vector<1x1x256xf32>
    %23 = arith.mulf %22, %13 : vector<1x1x256xf32>
    %24 = arith.addf %20, %23 : vector<1x1x256xf32>
    %c0_12 = arith.constant 0 : index
    %25 = memref.load %arg3[%c0_12] : memref<3xf32, #tpu.memory_space<smem>>
    %26 = vector.broadcast %25 : f32 to vector<1x1x256xf32>
    %27 = arith.addf %24, %26 : vector<1x1x256xf32>
    %c0_13 = arith.constant 0 : index
    %c0_14 = arith.constant 0 : index
    %c0_15 = arith.constant 0 : index
    %28 = vector.load %arg6[%c0_13, %c0_14, %c0_15] : memref<1x3x256xf32, #tpu.memory_space<vmem>>, vector<1x1x256xf32>
    tpu.vector_store %arg6[%c0_13, %c0_14, %c0_15], %27 {strides = array<i32>} : memref<1x3x256xf32, #tpu.memory_space<vmem>>, vector<1x1x256xf32>,
    %c1_16 = arith.constant 1 : index
    %c0_17 = arith.constant 0 : index
    %29 = memref.load %arg2[%c1_16, %c0_17] : memref<3x3xf32, #tpu.memory_space<smem>>
    %30 = vector.broadcast %29 : f32 to vector<1x1x256xf32>
    %31 = arith.mulf %30, %11 : vector<1x1x256xf32>
    %c1_18 = arith.constant 1 : index
    %c1_19 = arith.constant 1 : index
    %32 = memref.load %arg2[%c1_18, %c1_19] : memref<3x3xf32, #tpu.memory_space<smem>>
    %33 = vector.broadcast %32 : f32 to vector<1x1x256xf32>
    %34 = arith.mulf %33, %12 : vector<1x1x256xf32>
    %35 = arith.addf %31, %34 : vector<1x1x256xf32>
    %c1_20 = arith.constant 1 : index
    %c2_21 = arith.constant 2 : index
    %36 = memref.load %arg2[%c1_20, %c2_21] : memref<3x3xf32, #tpu.memory_space<smem>>
    %37 = vector.broadcast %36 : f32 to vector<1x1x256xf32>
    %38 = arith.mulf %37, %13 : vector<1x1x256xf32>
    %39 = arith.addf %35, %38 : vector<1x1x256xf32>
    %c1_22 = arith.constant 1 : index
    %40 = memref.load %arg3[%c1_22] : memref<3xf32, #tpu.memory_space<smem>>
    %41 = vector.broadcast %40 : f32 to vector<1x1x256xf32>
    %42 = arith.addf %39, %41 : vector<1x1x256xf32>
    %c0_23 = arith.constant 0 : index
    %c1_24 = arith.constant 1 : index
    %c0_25 = arith.constant 0 : index
    %43 = vector.load %arg6[%c0_23, %c1_24, %c0_25] : memref<1x3x256xf32, #tpu.memory_space<vmem>>, vector<1x1x256xf32>
    tpu.vector_store %arg6[%c0_23, %c1_24, %c0_25], %42 {strides = array<i32>} : memref<1x3x256xf32, #tpu.memory_space<vmem>>, vector<1x1x256xf32>,
    %c2_26 = arith.constant 2 : index
    %c0_27 = arith.constant 0 : index
    %44 = memref.load %arg2[%c2_26, %c0_27] : memref<3x3xf32, #tpu.memory_space<smem>>
    %45 = vector.broadcast %44 : f32 to vector<1x1x256xf32>
    %46 = arith.mulf %45, %11 : vector<1x1x256xf32>
    %c2_28 = arith.constant 2 : index
    %c1_29 = arith.constant 1 : index
    %47 = memref.load %arg2[%c2_28, %c1_29] : memref<3x3xf32, #tpu.memory_space<smem>>
    %48 = vector.broadcast %47 : f32 to vector<1x1x256xf32>
    %49 = arith.mulf %48, %12 : vector<1x1x256xf32>
    %50 = arith.addf %46, %49 : vector<1x1x256xf32>
    %c2_30 = arith.constant 2 : index
    %c2_31 = arith.constant 2 : index
    %51 = memref.load %arg2[%c2_30, %c2_31] : memref<3x3xf32, #tpu.memory_space<smem>>
    %52 = vector.broadcast %51 : f32 to vector<1x1x256xf32>
    %53 = arith.mulf %52, %13 : vector<1x1x256xf32>
    %54 = arith.addf %50, %53 : vector<1x1x256xf32>
    %c2_32 = arith.constant 2 : index
    %55 = memref.load %arg3[%c2_32] : memref<3xf32, #tpu.memory_space<smem>>
    %56 = vector.broadcast %55 : f32 to vector<1x1x256xf32>
    %57 = arith.addf %54, %56 : vector<1x1x256xf32>
    %c0_33 = arith.constant 0 : index
    %c2_34 = arith.constant 2 : index
    %c0_35 = arith.constant 0 : index
    %58 = vector.load %arg6[%c0_33, %c2_34, %c0_35] : memref<1x3x256xf32, #tpu.memory_space<vmem>>, vector<1x1x256xf32>
    tpu.vector_store %arg6[%c0_33, %c2_34, %c0_35], %57 {strides = array<i32>} : memref<1x3x256xf32, #tpu.memory_space<vmem>>, vector<1x1x256xf32>,
    return
  }
  func.func @transform_0(%arg0: i32, %arg1: i32) -> (i32, i32) {
    %c0_i32 = arith.constant 0 : i32
    %c0_i32_0 = arith.constant 0 : i32
    %c0_i32_1 = arith.constant 0 : i32
    return %c0_i32, %c0_i32_0 : i32, i32
  }
  func.func @transform_1(%arg0: i32, %arg1: i32) -> i32 {
    %c0_i32 = arith.constant 0 : i32
    %c0_i32_0 = arith.constant 0 : i32
    return %c0_i32 : i32
  }
  func.func @transform_2(%arg0: i32, %arg1: i32) -> (i32, i32, i32) {
    %c0_i32 = arith.constant 0 : i32
    %c0_i32_0 = arith.constant 0 : i32
    return %arg0, %c0_i32, %arg1 : i32, i32, i32
  }
  func.func @transform_3(%arg0: i32, %arg1: i32) -> (i32, i32, i32) {
    %c0_i32 = arith.constant 0 : i32
    %c0_i32_0 = arith.constant 0 : i32
    return %arg0, %c0_i32, %arg1 : i32, i32, i32
  }
  func.func @transform_4(%arg0: i32, %arg1: i32) -> (i32, i32, i32) {
    %c0_i32 = arith.constant 0 : i32
    %c0_i32_0 = arith.constant 0 : i32
    return %arg0, %c0_i32, %arg1 : i32, i32, i32
  }
}

</mosaic_0001>

<llo_original>
// kernel: dp_end.1
$region0: #{dp_end.1}
  #allocation0 [shape = 'u32[]', space=smem, size = 0x4, offset = 0x4, fixed_abs, tag = 'smem constant byte address 0x4 - core index']
  #allocation1 [shape = 'u32[144,128]{1,0:T(1,128)}', space=vmem, size = 0x12000, scoped, tag = 'internal scratch']
  %s0 = inlined_call_operand.vmem [shape: f32[3,3], index: 0, kind: input, shape index: {}]
  %s1 = inlined_call_operand.vmem [shape: f32[3], index: 1, kind: input, shape index: {}]
  %s2 = inlined_call_operand.vmem [shape: f32[2,3,256], index: 2, kind: input, shape index: {}]
  %s3 = inlined_call_operand.vmem [shape: f32[2,3,256], index: 3, kind: input, shape index: {}]
  %s4 = inlined_call_operand.vmem [shape: f32[2,3,256], index: 4, kind: output, shape index: {}]
  %s5 = sld [smem:[#allocation0]]
  $region57: #{dp_end.1} parent=0
    _
  %s7 = ssub.s32 1, %s5
  %s8 = scalar_select 0, %s7, %s5
  $region1: #{dp_end.1} parent=0
    #allocation2 [shape = 'u8[2048]{0}', space=smem, size = 0x800, scoped, tag = 'input window, operand 0, single buffered']
    #allocation3 [shape = 's32[2]{0}', space=sflag, size = 0x8, scoped, tag = 'scoped memory for dp_end.1']
    #allocation4 [shape = 'u8[512]{0}', space=smem, size = 0x200, scoped, tag = 'input window, operand 1, single buffered']
    #allocation5 [shape = 's32[1]{0}', space=sflag, size = 0x4, scoped, tag = 'scoped memory for dp_end.1']
    %9 = vsyncpa [#allocation3], 0
    %10 = vsyncpa [#allocation5], 0
    loop: start=0, step=1, limit=4
    $region2: #{dp_end.1} parent=1 // loop_pre_header
      _
    $region3: #{dp_end.1} parent=1 // loop_header
      %s12 = sphi 0, %s16
      %p13 = scmp.ge.s32.totalorder %s12, 4
      %s19 = sphi 0, %s31
      %s20 = sphi 0, %s27
      %s21 = sphi 0, %s19
      %s22 = sphi 0, %s20
      %s23 = sphi 0, %s21
      %s24 = sphi 0, %s22
      %s32 = sphi 0, %s32
      %s34 = sphi 0, %s32
      %s35 = sphi 0, %s34
      %s49 = sphi 0, %s35
      %s53 = sphi 0, %s53
      %s55 = sphi 0, %s53
      %s56 = sphi 0, %s55
      %s70 = sphi 0, %s56
      %s78 = sphi 0, %s80
      %s81 = sphi 0, %s78
      %s82 = sphi 0, %s81
      %s98 = sphi 0, %s82
      %s106 = sphi 0, %s108
      %s109 = sphi 0, %s106
      %s110 = sphi 0, %s109
      %s126 = sphi 0, %s110
      %s134 = sphi 0, %s136
      %s137 = sphi 0, %s134
      %s138 = sphi 0, %s137
      %s154 = sphi 0, %s138
    $region4: #{dp_end.1} parent=1 // loop_header_branch
      %15 = sbr.rel (%p13) target = $region8
    $region5: #{dp_end.1} parent=1 // loop_body
      %s17 = ssub.s32 %s12, 1
      %s18 = ssub.s32 %s12, 2
      %s25 = sadd.s32 1, %s20
      %p26 = scmp.ge.s32.totalorder %s25, 1
      %s27 = scalar_select %p26, 0, %s25
      %s28 = sadd.s32 1, %s19
      %s29 = scalar_select %p26, %s28, %s19
      %p30 = scmp.ge.s32.totalorder %s29, 2
      %s31 = scalar_select %p30, 0, %s29
      %s33 = sadd.s32 %s32, 1
      %p36 = scmp.eq.s32.totalorder %s12, 1
      %p37 = scmp.ne.s32.totalorder %s32, %s34
      %p38 = scmp.eq.s32.totalorder %s12, 0
      %p39 = por %p37, %p38
      %p40 = scmp.ne.s32.totalorder %s32, %s34
      %p41 = scmp.eq.s32.totalorder %s17, 1
      %p42 = por %p40, %p41
      %p43 = scmp.ne.s32.totalorder %s34, %s35
      %p44 = scmp.eq.s32.totalorder %s17, 0
      %p45 = por %p43, %p44
      %p46 = scmp.ne.s32.totalorder %s34, %s35
      %p47 = scmp.eq.s32.totalorder %s18, 1
      %p48 = por %p46, %p47
      %p50 = scmp.ne.s32.totalorder %s35, %s49
      %p51 = scmp.eq.s32.totalorder %s18, 0
      %p52 = por %p50, %p51
      %s54 = sadd.s32 %s53, 1
      %p57 = scmp.eq.s32.totalorder %s12, 1
      %p58 = scmp.ne.s32.totalorder %s53, %s55
      %p59 = scmp.eq.s32.totalorder %s12, 0
      %p60 = por %p58, %p59
      %p61 = scmp.ne.s32.totalorder %s53, %s55
      %p62 = scmp.eq.s32.totalorder %s17, 1
      %p63 = por %p61, %p62
      %p64 = scmp.ne.s32.totalorder %s55, %s56
      %p65 = scmp.eq.s32.totalorder %s17, 0
      %p66 = por %p64, %p65
      %p67 = scmp.ne.s32.totalorder %s55, %s56
      %p68 = scmp.eq.s32.totalorder %s18, 1
      %p69 = por %p67, %p68
      %p71 = scmp.ne.s32.totalorder %s56, %s70
      %p72 = scmp.eq.s32.totalorder %s18, 0
      %p73 = por %p71, %p72
      %s74 = ssub.s32 %s19, %s31
      %s75 = ssub.s32 %s20, %s27
      %s76 = sor.u32 %s74, %s75
      %p77 = scmp.eq.s32.totalorder %s76, 0
      %s79 = sadd.s32 %s78, 1
      %s80 = scalar_select %p77, %s78, %s79
      %p83 = pneg %p77
      %p84 = scmp.eq.s32.totalorder %s12, 1
      %p85 = por %p83, %p84
      %p86 = scmp.ne.s32.totalorder %s78, %s81
      %p87 = scmp.eq.s32.totalorder %s12, 0
      %p88 = por %p86, %p87
      %p89 = scmp.ne.s32.totalorder %s78, %s81
      %p90 = scmp.eq.s32.totalorder %s17, 1
      %p91 = por %p89, %p90
      %p92 = scmp.ne.s32.totalorder %s81, %s82
      %p93 = scmp.eq.s32.totalorder %s17, 0
      %p94 = por %p92, %p93
      %p95 = scmp.ne.s32.totalorder %s81, %s82
      %p96 = scmp.eq.s32.totalorder %s18, 1
      %p97 = por %p95, %p96
      %p99 = scmp.ne.s32.totalorder %s82, %s98
      %p100 = scmp.eq.s32.totalorder %s18, 0
      %p101 = por %p99, %p100
      %s102 = ssub.s32 %s19, %s31
      %s103 = ssub.s32 %s20, %s27
      %s104 = sor.u32 %s102, %s103
      %p105 = scmp.eq.s32.totalorder %s104, 0
      %s107 = sadd.s32 %s106, 1
      %s108 = scalar_select %p105, %s106, %s107
      %p111 = pneg %p105
      %p112 = scmp.eq.s32.totalorder %s12, 1
      %p113 = por %p111, %p112
      %p114 = scmp.ne.s32.totalorder %s106, %s109
      %p115 = scmp.eq.s32.totalorder %s12, 0
      %p116 = por %p114, %p115
      %p117 = scmp.ne.s32.totalorder %s106, %s109
      %p118 = scmp.eq.s32.totalorder %s17, 1
      %p119 = por %p117, %p118
      %p120 = scmp.ne.s32.totalorder %s109, %s110
      %p121 = scmp.eq.s32.totalorder %s17, 0
      %p122 = por %p120, %p121
      %p123 = scmp.ne.s32.totalorder %s109, %s110
      %p124 = scmp.eq.s32.totalorder %s18, 1
      %p125 = por %p123, %p124
      %p127 = scmp.ne.s32.totalorder %s110, %s126
      %p128 = scmp.eq.s32.totalorder %s18, 0
      %p129 = por %p127, %p128
      %s130 = ssub.s32 %s19, %s31
      %s131 = ssub.s32 %s20, %s27
      %s132 = sor.u32 %s130, %s131
      %p133 = scmp.eq.s32.totalorder %s132, 0
      %s135 = sadd.s32 %s134, 1
      %s136 = scalar_select %p133, %s134, %s135
      %p139 = pneg %p133
      %p140 = scmp.eq.s32.totalorder %s12, 1
      %p141 = por %p139, %p140
      %p142 = scmp.ne.s32.totalorder %s134, %s137
      %p143 = scmp.eq.s32.totalorder %s12, 0
      %p144 = por %p142, %p143
      %p145 = scmp.ne.s32.totalorder %s134, %s137
      %p146 = scmp.eq.s32.totalorder %s17, 1
      %p147 = por %p145, %p146
      %p148 = scmp.ne.s32.totalorder %s137, %s138
      %p149 = scmp.eq.s32.totalorder %s17, 0
      %p150 = por %p148, %p149
      %p151 = scmp.ne.s32.totalorder %s137, %s138
      %p152 = scmp.eq.s32.totalorder %s18, 1
      %p153 = por %p151, %p152
      %p155 = scmp.ne.s32.totalorder %s138, %s154
      %p156 = scmp.eq.s32.totalorder %s18, 0
      %p157 = por %p155, %p156
      %p158 = scmp.le.s32.totalorder 1, %s12
      %p159 = scmp.lt.s32.totalorder %s12, 3
      %p160 = pnand %p158, %p159
      %p161 = pneg %p160
      // Predicated region
      $region9: #{dp_end.1} parent=5 // pred_check
        _
      $region10: #{dp_end.1} parent=5 // pred_check_branch
        %163 = sbr.rel (%p160) target = $region12
      $region11: #{dp_end.1} parent=5 // pred_region
        %s164 = ssub.s32 %s12, 1
        // Predicated region
        $region13: #{dp_end.1} parent=11 // pred_check
          %p165 = pneg %p45
        $region14: #{dp_end.1} parent=11 // pred_check_branch
          %167 = sbr.rel (%p165) target = $region16
        $region15: #{dp_end.1} parent=11 // pred_region
          %s169 = ssub.s32 64, 64
          %170 = vsyncadd [#allocation3], %s169
          %s172 = sshll.u32 %s0, 4
          %s173 = int_to_ptr.vmem [resolvable:$true] %s172
          %175 = dma.vmem_to_smem %s173, 64, [#allocation2], [#allocation3]
        $region16: #{dp_end.1} parent=11 // pred_fallthru
          _
        // Predicated region
        $region17: #{dp_end.1} parent=11 // pred_check
          %p176 = pneg %p66
        $region18: #{dp_end.1} parent=11 // pred_check_branch
          %178 = sbr.rel (%p176) target = $region20
        $region19: #{dp_end.1} parent=11 // pred_region
          %s180 = ssub.s32 16, 16
          %181 = vsyncadd [#allocation5], %s180
          %s183 = sshll.u32 %s1, 4
          %s184 = int_to_ptr.vmem [resolvable:$true] %s183
          %186 = dma.vmem_to_smem %s184, 16, [#allocation4], [#allocation5]
        $region20: #{dp_end.1} parent=11 // pred_fallthru
          _
      $region12: #{dp_end.1} parent=5 // pred_fallthru
        _
      %p187 = scmp.lt.s32.totalorder %s12, 2
      // Predicated region
      $region21: #{dp_end.1} parent=5 // pred_check
        %p188 = pneg %p187
      $region22: #{dp_end.1} parent=5 // pred_check_branch
        %190 = sbr.rel (%p188) target = $region24
      $region23: #{dp_end.1} parent=5 // pred_region
        // Predicated region
        $region25: #{dp_end.1} parent=23 // pred_check
          %p191 = pneg %p88
        $region26: #{dp_end.1} parent=23 // pred_check_branch
          %193 = sbr.rel (%p191) target = $region28
        $region27: #{dp_end.1} parent=23 // pred_region
          %s194 = smul.u32 2, %s20
          %p195 = scmp.lt.s32.totalorder %s19, 1
          %s196 = scalar_select %p195, %s19, 1
          %p197 = scmp.lt.s32.totalorder %s194, 1
          %s198 = scalar_select %p197, %s194, 1
          %s199 = smul.addr %s196, 2
          %s200 = sadd.s32 %s198, %s199
          %s201 = smul.addr %s200, 4
          %s202 = scalar_lea.vmem %s2, %s201
          %s203 = smul.u32 2, %s20
        $region28: #{dp_end.1} parent=23 // pred_fallthru
          _
        // Predicated region
        $region29: #{dp_end.1} parent=23 // pred_check
          %p204 = pneg %p116
        $region30: #{dp_end.1} parent=23 // pred_check_branch
          %206 = sbr.rel (%p204) target = $region32
        $region31: #{dp_end.1} parent=23 // pred_region
          %s207 = smul.u32 2, %s20
          %p208 = scmp.lt.s32.totalorder %s19, 1
          %s209 = scalar_select %p208, %s19, 1
          %p210 = scmp.lt.s32.totalorder %s207, 1
          %s211 = scalar_select %p210, %s207, 1
          %s212 = smul.addr %s209, 2
          %s213 = sadd.s32 %s211, %s212
          %s214 = smul.addr %s213, 4
          %s215 = scalar_lea.vmem %s3, %s214
          %s216 = smul.u32 2, %s20
        $region32: #{dp_end.1} parent=23 // pred_fallthru
          _
      $region24: #{dp_end.1} parent=5 // pred_fallthru
        _
      %p217 = scmp.le.s32.totalorder 1, %s12
      %p218 = scmp.lt.s32.totalorder %s12, 3
      %p219 = pnand %p217, %p218
      %p220 = pneg %p219
      // Predicated region
      $region33: #{dp_end.1} parent=5 // pred_check
        _
      $region34: #{dp_end.1} parent=5 // pred_check_branch
        %222 = sbr.rel (%p219) target = $region36
      $region35: #{dp_end.1} parent=5 // pred_region
        %s223 = ssub.s32 %s12, 1
        // Predicated region
        $region37: #{dp_end.1} parent=35 // pred_check
          %p224 = pneg %p45
        $region38: #{dp_end.1} parent=35 // pred_check_branch
          %226 = sbr.rel (%p224) target = $region40
        $region39: #{dp_end.1} parent=35 // pred_region
          %227 = dma.done [#allocation3], 64
        $region40: #{dp_end.1} parent=35 // pred_fallthru
          _
        // Predicated region
        $region41: #{dp_end.1} parent=35 // pred_check
          %p228 = pneg %p66
        $region42: #{dp_end.1} parent=35 // pred_check_branch
          %230 = sbr.rel (%p228) target = $region44
        $region43: #{dp_end.1} parent=35 // pred_region
          %231 = dma.done [#allocation5], 16
        $region44: #{dp_end.1} parent=35 // pred_fallthru
          _
        %232 = sfence
        %p233 = pneg %p45
        %p234 = pneg %p42
        %p235 = pneg %p66
        %p236 = pneg %p63
        %s237 = smul.u32 2, %s22
        %p238 = scmp.lt.s32.totalorder %s21, 1
        %s239 = scalar_select %p238, %s21, 1
        %p240 = scmp.lt.s32.totalorder %s237, 1
        %s241 = scalar_select %p240, %s237, 1
        %s242 = smul.addr %s239, 2
        %s243 = sadd.s32 %s241, %s242
        %s244 = smul.addr %s243, 4
        %s245 = scalar_lea.vmem %s2, %s244
        %p246 = pneg %p94
        %p247 = pneg %p91
        %s248 = smul.u32 2, %s22
        %p249 = scmp.lt.s32.totalorder %s21, 1
        %s250 = scalar_select %p249, %s21, 1
        %p251 = scmp.lt.s32.totalorder %s248, 1
        %s252 = scalar_select %p251, %s248, 1
        %s253 = smul.addr %s250, 2
        %s254 = sadd.s32 %s252, %s253
        %s255 = smul.addr %s254, 4
        %s256 = scalar_lea.vmem %s3, %s255
        %p257 = pneg %p122
        %p258 = pneg %p119
        %p259 = pneg %p150
        %p260 = pneg %p147
        %s261 = smul.u32 2, %s22
        %p262 = scmp.lt.s32.totalorder %s21, 1
        %s263 = scalar_select %p262, %s21, 1
        %p264 = scmp.lt.s32.totalorder %s261, 1
        %s265 = scalar_select %p264, %s261, 1
        %s266 = smul.addr %s263, 2
        %s267 = sadd.s32 %s265, %s266
        %s268 = smul.addr %s267, 4
        %s269 = scalar_lea.vmem %s4, %s268
        %s270 = smul.u32 2, %s22
        %p271 = scmp.lt.s32.totalorder %s21, 1
        %s272 = scalar_select %p271, %s21, 1
        %p273 = scmp.lt.s32.totalorder %s270, 1
        %s274 = scalar_select %p273, %s270, 1
        %s275 = smul.addr %s272, 2
        %s276 = sadd.s32 %s274, %s275
        %s277 = smul.addr %s276, 4
        %s278 = scalar_lea.vmem %s2, %s277
        %s279 = smul.u32 2, %s22
        %s280 = smul.u32 2, %s22
        %p281 = scmp.lt.s32.totalorder %s21, 1
        %s282 = scalar_select %p281, %s21, 1
        %p283 = scmp.lt.s32.totalorder %s280, 1
        %s284 = scalar_select %p283, %s280, 1
        %s285 = smul.addr %s282, 2
        %s286 = sadd.s32 %s284, %s285
        %s287 = smul.addr %s286, 4
        %s288 = scalar_lea.vmem %s3, %s287
        %s289 = smul.u32 2, %s22
        %s290 = smul.u32 2, %s22
        %p291 = scmp.lt.s32.totalorder %s21, 1
        %s292 = scalar_select %p291, %s21, 1
        %p293 = scmp.lt.s32.totalorder %s290, 1
        %s294 = scalar_select %p293, %s290, 1
        %s295 = smul.addr %s292, 2
        %s296 = sadd.s32 %s294, %s295
        %s297 = smul.addr %s296, 4
        %s298 = scalar_lea.vmem %s4, %s297
        %s299 = smul.u32 2, %s22
        %v300 = vld [vmem:[%s278] sm:$0x77]
        %v301 = vadd.f32 %v300, 1.0
        %v302 = vld [vmem:[%s288] sm:$0x77]
        %v303 = vadd.f32 %v302, 1.0
        %v304 = vmul.f32 %v301, %v303
        %v305 = vmul.f32 %v304, 0.5
        %v306 = vsub.f32 %v305, 1.0
        %s307 = sld [smem:[#allocation2]]
        %v308 = vstv %s307
        %v309 = vmul.f32 %v308, %v306
        %s310 = sld [smem:[#allocation2 + $0x1]]
        %v311 = vstv %s310
        %v312 = vmul.f32 %v311, %v306
        %v314 = vrot.slane %v312, 5
        %v315 = vrot.slane %v314, 4
        %v317 = vadd.f32 %v309, %v315
        %s318 = sld [smem:[#allocation2 + $0x2]]
        %v319 = vstv %s318
        %v320 = vmul.f32 %v319, %v306
        %v322 = vrot.slane %v320, 6
        %v323 = vrot.slane %v322, 4
        %v325 = vadd.f32 %v317, %v323
        %s326 = sld [smem:[#allocation4]]
        %v327 = vstv %s326
        %v328 = vadd.f32 %v325, %v327
        %v331 = vunpack.c.l.s4 1966171168
        %v332 = vunpack.c.0.s8 %v331
        %v333 = vlaneseq
        %v334 = vshrl.u32 %v333, 7
        %v335 = vsub.s32 %v332, %v334
        %v336 = vrot.slane %v328, %v335
        %v338 = vunpack.c.l.s4 1966171168
        %v339 = vunpack.c.0.s8 %v338
        %v340 = vlaneseq
        %v341 = vshrl.u32 %v340, 7
        %v342 = vsub.s32 %v339, %v341
        %v343 = vrot.slane %v336, %v342
        %v345 = vlaneseq
        %vm346 = vcmp.ge.s32.totalorder %v345, 0
        %vm347 = vcmp.lt.s32.totalorder %v345, 256
        %vm348 = vmand %vm346, %vm347
        %349 = vst.msk [vmem:[%s298] ss:$4 sm:$0x3] %vm348, %v343
        %s350 = sld [smem:[#allocation2 + $0x80]]
        %v351 = vstv %s350
        %v352 = vmul.f32 %v351, %v306
        %s353 = sld [smem:[#allocation2 + $0x81]]
        %v354 = vstv %s353
        %v355 = vmul.f32 %v354, %v306
        %v357 = vrot.slane %v355, 5
        %v358 = vrot.slane %v357, 4
        %v360 = vadd.f32 %v352, %v358
        %s361 = sld [smem:[#allocation2 + $0x82]]
        %v362 = vstv %s361
        %v363 = vmul.f32 %v362, %v306
        %v365 = vrot.slane %v363, 6
        %v366 = vrot.slane %v365, 4
        %v368 = vadd.f32 %v360, %v366
        %s369 = sld [smem:[#allocation4 + $0x1]]
        %v370 = vstv %s369
        %v371 = vadd.f32 %v368, %v370
        %v374 = vunpack.c.l.s4 1966171168
        %v375 = vunpack.c.0.s8 %v374
        %v376 = vlaneseq
        %v377 = vshrl.u32 %v376, 7
        %v378 = vsub.s32 %v375, %v377
        %v379 = vrot.slane %v371, %v378
        %v381 = vunpack.c.l.s4 1966171168
        %v382 = vunpack.c.0.s8 %v381
        %v383 = vlaneseq
        %v384 = vshrl.u32 %v383, 7
        %v385 = vsub.s32 %v382, %v384
        %v386 = vrot.slane %v379, %v385
        %s388 = scalar_lea.vmem %s298, 1
        %389 = vst.msk [vmem:[%s388] ss:$4 sm:$0x3] %vm348, %v386
        %s390 = sld [smem:[#allocation2 + $0x100]]
        %v391 = vstv %s390
        %v392 = vmul.f32 %v391, %v306
        %s393 = sld [smem:[#allocation2 + $0x101]]
        %v394 = vstv %s393
        %v395 = vmul.f32 %v394, %v306
        %v397 = vrot.slane %v395, 5
        %v398 = vrot.slane %v397, 4
        %v400 = vadd.f32 %v392, %v398
        %s401 = sld [smem:[#allocation2 + $0x102]]
        %v402 = vstv %s401
        %v403 = vmul.f32 %v402, %v306
        %v405 = vrot.slane %v403, 6
        %v406 = vrot.slane %v405, 4
        %v408 = vadd.f32 %v400, %v406
        %s409 = sld [smem:[#allocation4 + $0x2]]
        %v410 = vstv %s409
        %v411 = vadd.f32 %v408, %v410
        %v414 = vunpack.c.l.s4 1966171168
        %v415 = vunpack.c.0.s8 %v414
        %v416 = vlaneseq
        %v417 = vshrl.u32 %v416, 7
        %v418 = vsub.s32 %v415, %v417
        %v419 = vrot.slane %v411, %v418
        %v421 = vunpack.c.l.s4 1966171168
        %v422 = vunpack.c.0.s8 %v421
        %v423 = vlaneseq
        %v424 = vshrl.u32 %v423, 7
        %v425 = vsub.s32 %v422, %v424
        %v426 = vrot.slane %v419, %v425
        %s428 = scalar_lea.vmem %s298, 2
        %429 = vst.msk [vmem:[%s428] ss:$4 sm:$0x3] %vm348, %v426
        %s430 = smul.u32 2, %s22
        %p431 = scmp.lt.s32.totalorder %s21, 1
        %s432 = scalar_select %p431, %s21, 1
        %p433 = scmp.lt.s32.totalorder %s430, 1
        %s434 = scalar_select %p433, %s430, 1
        %s435 = smul.addr %s432, 2
        %s436 = sadd.s32 %s434, %s435
        %s437 = smul.addr %s436, 4
        %s438 = scalar_lea.vmem %s4, %s437
        // Predicated region
        $region45: #{dp_end.1} parent=35 // pred_check
          %p439 = pneg %p147
        $region46: #{dp_end.1} parent=35 // pred_check_branch
          %441 = sbr.rel (%p439) target = $region48
        $region47: #{dp_end.1} parent=35 // pred_region
          %s442 = smul.u32 2, %s22
        $region48: #{dp_end.1} parent=35 // pred_fallthru
          _
      $region36: #{dp_end.1} parent=5 // pred_fallthru
        _
      %p443 = scmp.le.s32.totalorder 2, %s12
      // Predicated region
      $region49: #{dp_end.1} parent=5 // pred_check
        %p444 = pneg %p443
      $region50: #{dp_end.1} parent=5 // pred_check_branch
        %446 = sbr.rel (%p444) target = $region52
      $region51: #{dp_end.1} parent=5 // pred_region
        %s447 = ssub.s32 %s12, 2
        // Predicated region
        $region53: #{dp_end.1} parent=51 // pred_check
          %p448 = pneg %p153
        $region54: #{dp_end.1} parent=51 // pred_check_branch
          %450 = sbr.rel (%p448) target = $region56
        $region55: #{dp_end.1} parent=51 // pred_region
          %s451 = smul.u32 2, %s24
          %p452 = scmp.lt.s32.totalorder %s23, 1
          %s453 = scalar_select %p452, %s23, 1
          %p454 = scmp.lt.s32.totalorder %s451, 1
          %s455 = scalar_select %p454, %s451, 1
          %s456 = smul.addr %s453, 2
          %s457 = sadd.s32 %s455, %s456
          %s458 = smul.addr %s457, 4
          %s459 = scalar_lea.vmem %s4, %s458
        $region56: #{dp_end.1} parent=51 // pred_fallthru
          _
      $region52: #{dp_end.1} parent=5 // pred_fallthru
        _
    $region6: #{dp_end.1} parent=1 // loop_footer
      %s16 = sadd.s32 1, %s12
    $region7: #{dp_end.1} parent=1 // loop_footer_branch
      %11 = sbr.rel target = $region3
    $region8: #{dp_end.1} parent=1 // loop_exit
      _
    %460 = vsyncpa [#allocation3], 1
    %s461 = scalar_lea.sflag [#allocation3], 1
    %462 = vsyncpa %s461, 1
    %463 = vsyncpa [#allocation5], 1

</llo_original>
